<compile_context>
chip_gen: v6e
topology: v6e:2x2x1
jax: 0.10.0
libtpu: 0.0.40
codegen_flags: <defaults>
</compile_context>

<pallas_src>
import jax
import jax.numpy as jnp
import numpy as np
from jax import lax
from jax.experimental import pallas as pl
from jax.experimental.pallas import tpu as pltpu

# ---- model dimensions (fixed by the PyTorch module) -------------------------
EMB = 5                 # percent-embedding width
NVOCAB = 100            # percent-embedding vocabulary
HID = 10                # LSTM hidden size
NDIR = 6                # 3 bidirectional LSTMs x 2 directions
NGATE = NDIR * HID      # 60 = concatenated LSTM output width
FEAT = EMB + NGATE      # 65 = deepsets / fc1 "x" width
DEEP = 10               # deepsets mapping width
FC1_OUT = 20

# ---- packed-weight / fused-matmul layout ------------------------------------
GSEG = 64                                   # gate segment width (60 used + 4 zero pad)
LANE_I, LANE_G, LANE_O = 0, GSEG, 2 * GSEG  # i / g / o gate lane offsets (64-aligned)
LANE_DEEP = 3 * GSEG                        # 192: deepsets pre-act (xp + bias share)
LANE_FC1 = LANE_DEEP + FC1_OUT              # 212: fc1 pre-act (xp + bias share)
NLANE = 256                                 # fused matmul-1 output width (lane-dense)
MXU_DTYPE = jnp.bfloat16                    # matmul operand dtype (f32 accumulate)


def _rup(x, m):
    return ((x + m - 1) // m) * m


def make_layout(n_grad):
    """Row layout of the packed weight array / fused matmul-1 contraction axis."""
    r_gn = NVOCAB                       # grad_norm rows start (one-hot block is [0,100))
    r_gc = r_gn + n_grad                # grad_cos rows
    r_l = r_gc + n_grad                 # loss row
    r_one = r_l + 1                     # constant-1 (bias) row
    k1 = _rup(r_one + 1, 16)            # matmul-1 depth (zero-padded to bf16 sublane tile)
    rb2 = k1                            # matmul-2 RHS rows (h -> [deep | fc1]), GSEG rows
    rb3 = rb2 + GSEG                    # matmul-3 RHS rows (t1 -> fc1 lanes), FC1_OUT rows
    rows = _rup(rb3 + FC1_OUT, 16)
    return dict(r_gn=r_gn, r_gc=r_gc, r_l=r_l, r_one=r_one,
                k1=k1, rb2=rb2, rb3=rb3, rows=rows)


def pack_params(params, n_grad, T):
    """Fuse + pack every weight/bias into one bf16 matmul pack and a tiny f32 fc2 row."""
    if T < 2:
        raise ValueError("the deepsets term divides by (T - 1); need T >= 2")
    L = make_layout(n_grad)
    inv = 1.0 / (T - 1)

    f = lambda a: np.asarray(a, np.float32)
    emb = f(params["emb"])                                   # (100, 5)
    h1_w, h1_b = f(params["h1_w"]), f(params["h1_b"])[0]     # (65,20), (20,)
    h2_w, h2_b = f(params["h2_w"]), f(params["h2_b"])[0]     # (20,10), (10,)
    fc1_w, fc1_b = f(params["fc1_w"]), f(params["fc1_b"])[0] # (75,20), (20,)

    W = np.zeros((L["rows"], NLANE), np.float32)

    # --- fused gate weights / biases (i at lanes 0:, g at 64:, o at 128:) -----
    dirs = [("g1f", L["r_gn"], 0), ("g1b", L["r_gn"], HID),
            ("g2f", L["r_gc"], 2 * HID), ("g2b", L["r_gc"], 3 * HID),
            ("lf", L["r_l"], 4 * HID), ("lb", L["r_l"], 5 * HID)]
    # gate order in the (4, in, HID) params: i=0, f=1 (unused, c0 == 0), g=2, o=3
    for gidx, seg in ((0, LANE_I), (2, LANE_G), (3, LANE_O)):
        for name, roff, doff in dirs:
            w = f(params[f"{name}_w"][gidx])                 # (in_dim, HID)
            W[roff:roff + w.shape[0], seg + doff:seg + doff + HID] = w
            W[L["r_one"], seg + doff:seg + doff + HID] = f(params[f"{name}_b"][gidx, 0])

    # --- deepsets rewritten exactly as a matmul:  x_C @ h1_w == x @ D1 --------
    D1 = (h1_w.sum(axis=0)[None, :] - h1_w) * inv            # (65, 20)
    fc1_x, fc1_h = fc1_w[:FEAT], fc1_w[FEAT:]                # (65,20), (10,20)

    # matmul-1 one-hot rows: percent embedding pre-composed with its projections
    W[0:NVOCAB, LANE_DEEP:LANE_DEEP + FC1_OUT] = emb @ D1[:EMB]
    W[0:NVOCAB, LANE_FC1:LANE_FC1 + FC1_OUT] = emb @ fc1_x[:EMB]
    # matmul-1 bias row (multiplies the constant-1 LHS column)
    W[L["r_one"], LANE_DEEP:LANE_DEEP + FC1_OUT] = h1_b
    W[L["r_one"], LANE_FC1:LANE_FC1 + FC1_OUT] = fc1_b + h2_b @ fc1_h

    # matmul-2 rows (LHS = h): h's share of the deepsets and fc1 projections
    W[L["rb2"]:L["rb2"] + NGATE, 0:FC1_OUT] = D1[EMB:]
    W[L["rb2"]:L["rb2"] + NGATE, FC1_OUT:2 * FC1_OUT] = fc1_x[EMB:]

    # matmul-3 rows: deepsets second Linear composed with fc1's hmap block
    W[L["rb3"]:L["rb3"] + FC1_OUT, 0:FC1_OUT] = h2_w @ fc1_h

    V = np.zeros((1, 128), np.float32)                       # fc2 kept in f32
    V[0, 0:FC1_OUT] = f(params["fc2_w"])[:, 0]
    V[0, FC1_OUT] = f(params["fc2_b"])[0, 0]

    return jnp.asarray(W).astype(MXU_DTYPE), jnp.asarray(V)


def make_kernel(n_grad, T, L):
    n = n_grad
    k1, rb2, rb3 = L["k1"], L["rb2"], L["rb3"]
    pad = k1 - (NVOCAB + 2 * n + 2)

    def sig(v):                       # sigmoid via tanh: single EUP op class
        return 0.5 * jnp.tanh(0.5 * v) + 0.5

    def kernel(pt_ref, gn_ref, gc_ref, l_ref, w_ref, v_ref, out_ref):
        # -- assemble the fused LHS: [one-hot(pt) | grad_norm | grad_cos | loss | 1 | 0]
        lane = lax.broadcasted_iota(jnp.int32, (T, NVOCAB), 1)
        onehot = (lane == pt_ref[...]).astype(jnp.float32)    # embedding gather as one-hot
        pieces = [onehot, gn_ref[...], gc_ref[...], l_ref[...],
                  jnp.ones((T, 1), jnp.float32)]
        if pad:
            pieces.append(jnp.zeros((T, pad), jnp.float32))
        xlhs = jnp.concatenate(pieces, axis=1).astype(MXU_DTYPE)          # (T, k1)

        # -- matmul 1: every x-LHS product (gates, deepsets, fc1, emb, biases) fused
        r1 = jnp.dot(xlhs, w_ref[0:k1, :], preferred_element_type=jnp.float32)  # (T,256)

        i_g = sig(r1[:, LANE_I:LANE_I + GSEG])
        g_g = jnp.tanh(r1[:, LANE_G:LANE_G + GSEG])
        o_g = sig(r1[:, LANE_O:LANE_O + GSEG])
        h = o_g * jnp.tanh(i_g * g_g)          # (T,64): lanes 0:60 == x[:,5:65], pad == 0

        # -- matmul 2: h -> [deepsets pre | fc1 pre]
        r2 = jnp.dot(h.astype(MXU_DTYPE), w_ref[rb2:rb2 + GSEG, 0:2 * FC1_OUT],
                     preferred_element_type=jnp.float32)                 # (T, 40)

        t1 = jnp.tanh(r1[:, LANE_DEEP:LANE_DEEP + FC1_OUT] + r2[:, 0:FC1_OUT])   # (T,20)

        # -- matmul 3: t1 @ (h2_w @ fc1_w[65:75])  (hmap never materialized)
        r3 = jnp.dot(t1.astype(MXU_DTYPE), w_ref[rb3:rb3 + FC1_OUT, 0:FC1_OUT],
                     preferred_element_type=jnp.float32)                 # (T, 20)

        z1 = jnp.tanh(r1[:, LANE_FC1:LANE_FC1 + FC1_OUT] + r2[:, FC1_OUT:2 * FC1_OUT] + r3)

        # -- fc2 (20 -> 1): f32 VPU broadcast multiply + lane reduce (no N=1 matmul)
        fc2_w = v_ref[0:1, 0:FC1_OUT]
        fc2_b = v_ref[0:1, FC1_OUT:FC1_OUT + 1]
        out_ref[...] = jnp.sum(z1 * fc2_w, axis=1, keepdims=True) + fc2_b

    return kernel


def scheduler_forward_batched(l, grad_norm, grad_cos, pt, wpack, vpack):
    """B independent Scheduler.forward evaluations in ONE pallas_call.

    l: (B,T,1) f32, grad_norm/grad_cos: (B,T,n) f32, pt: (B,T,1) int32.
    Returns (B,T,1) f32.  Weights stay VMEM-resident across the grid.
    """
    B, T, n = grad_norm.shape
    L = make_layout(n)
    assert wpack.shape == (L["rows"], NLANE) and vpack.shape == (1, 128)

    bt = lambda w: pl.BlockSpec((None, T, w), lambda b: (b, 0, 0))
    return pl.pallas_call(
        make_kernel(n, T, L),
        grid=(B,),
        in_specs=[bt(1),                                             # pt
                  bt(n),                                             # grad_norm
                  bt(n),                                             # grad_cos
                  bt(1),                                             # loss
                  pl.BlockSpec((L["rows"], NLANE), lambda b: (0, 0)),  # weights (resident)
                  pl.BlockSpec((1, 128), lambda b: (0, 0))],           # fc2 vector (f32)
        out_specs=bt(1),
        out_shape=jax.ShapeDtypeStruct((B, T, 1), jnp.float32),
        compiler_params=pltpu.CompilerParams(dimension_semantics=("parallel",)),
    )(pt, grad_norm, grad_cos, l, wpack, vpack)


def scheduler_forward(l, grad_norm, grad_cos, pt, wpack, vpack):
    """Single-buffer convenience wrapper matching Scheduler.forward(l, [gn, gc], pt)."""
    T = l.shape[0]
    out = scheduler_forward_batched(
        l.reshape(1, T, 1).astype(jnp.float32),
        grad_norm[None].astype(jnp.float32),
        grad_cos[None].astype(jnp.float32),
        pt.reshape(1, T, 1).astype(jnp.int32), wpack, vpack)
    return out[0]


def init_params(key, n_grad):
    """Deterministic synthetic parameters (shapes follow Scheduler.__init__)."""
    ks = iter(jax.random.split(key, 32))

    def w(shape, scale=0.2):
        return (scale * jax.random.normal(next(ks), shape)).astype(jnp.float32)

    p = {"emb": w((NVOCAB, EMB))}                    # nn.Embedding(100, 5)
    # bidirectional LSTMs: gate-split W_ih as (4, in, HID), combined b_ih+b_hh (4, 1, HID)
    for name, in_dim in (("g1", n_grad), ("g2", n_grad), ("l", 1)):
        for d in ("f", "b"):
            p[f"{name}{d}_w"] = w((4, in_dim, HID))
            p[f"{name}{d}_b"] = w((4, 1, HID))
    p["h1_w"], p["h1_b"] = w((FEAT, FC1_OUT)), w((1, FC1_OUT))          # Linear(65, 20)
    p["h2_w"], p["h2_b"] = w((FC1_OUT, DEEP)), w((1, DEEP))             # Linear(20, 10)
    p["fc1_w"], p["fc1_b"] = w((FEAT + DEEP, FC1_OUT)), w((1, FC1_OUT)) # Linear(75, 20)
    p["fc2_w"], p["fc2_b"] = w((FC1_OUT, 1)), w((1, 1))                 # Linear(20, 1)
    return p


def reference_forward(l, grad_norm, grad_cos, pt, params):
    """Pure-JAX f32 reference replicating the PyTorch forward semantics."""
    T = l.shape[0]

    def gated(x, w, b):
        i = jax.nn.sigmoid(x @ w[0] + b[0])
        g = jnp.tanh(x @ w[2] + b[2])
        o = jax.nn.sigmoid(x @ w[3] + b[3])
        return o * jnp.tanh(i * g)

    xp = params["emb"][pt]
    lv = l.reshape(T, 1)
    go1 = jnp.concatenate([gated(grad_norm, params["g1f_w"], params["g1f_b"]),
                           gated(grad_norm, params["g1b_w"], params["g1b_b"])], axis=1)
    go2 = jnp.concatenate([gated(grad_cos, params["g2f_w"], params["g2f_b"]),
                           gated(grad_cos, params["g2b_w"], params["g2b_b"])], axis=1)
    lo = jnp.concatenate([gated(lv, params["lf_w"], params["lf_b"]),
                          gated(lv, params["lb_w"], params["lb_b"])], axis=1)
    x = jnp.concatenate([xp, go1, go2, lo], axis=1)
    x_c = (jnp.sum(x, axis=1, keepdims=True) - x) / (T - 1)
    h = jnp.tanh(x_c @ params["h1_w"] + params["h1_b"]) @ params["h2_w"] + params["h2_b"]
    xh = jnp.concatenate([x, h], axis=1)
    z = jnp.tanh(xh @ params["fc1_w"] + params["fc1_b"])
    return z @ params["fc2_w"] + params["fc2_b"]


if __name__ == "__main__":
    T = 8        # number of tasks (buffer entries)
    N = 4        # len(grad_indexes): per-layer grad-norm / grad-cos feature dim
    B = 4        # batched scheduler evaluations amortizing launch + weight DMA

    key = jax.random.PRNGKey(0)
    k_par, k_l, k_g1, k_g2, k_pt = jax.random.split(key, 5)

    params = init_params(k_par, N)
    l = jax.random.uniform(k_l, (B, T, 1), jnp.float32)             # task losses
    grad_norm = jax.random.normal(k_g1, (B, T, N), jnp.float32)     # input[0]
    grad_cos = jax.random.normal(k_g2, (B, T, N), jnp.float32)      # input[1]
    pt = jax.random.randint(k_pt, (B, T, 1), 0, NVOCAB, jnp.int32)  # percent indices

    wpack, vpack = pack_params(params, N, T)        # one-time host-side weight fusion/pack

    z = scheduler_forward_batched(l, grad_norm, grad_cos, pt, wpack, vpack)
    z = jax.block_until_ready(z)
    assert z.shape == (B, T, 1)

    # bf16 MXU operands (f32 accumulation / f32 EUP math): tolerance widened from the
    # f32-only 5e-3 to 2e-2 accordingly.
    for b in range(B):
        z_ref = reference_forward(l[b, :, 0], grad_norm[b], grad_cos[b], pt[b, :, 0], params)
        np.testing.assert_allclose(np.asarray(z[b]), np.asarray(z_ref), rtol=2e-2, atol=2e-2)

    print("KERNEL_OK")
</pallas_src>

<mosaic_0001>
module attributes {stable_mosaic.version = 11 : i64} {
  func.func @kernel(%arg0: i32, %arg1: memref<1x8x1xi32, #tpu.memory_space<vmem>>, %arg2: memref<1x8x4xf32, #tpu.memory_space<vmem>>, %arg3: memref<1x8x4xf32, #tpu.memory_space<vmem>>, %arg4: memref<1x8x1xf32, #tpu.memory_space<vmem>>, %arg5: memref<208x256xbf16, #tpu.memory_space<vmem>>, %arg6: memref<1x128xf32, #tpu.memory_space<vmem>>, %arg7: memref<1x8x1xf32, #tpu.memory_space<vmem>>) attributes {dimension_semantics = [#tpu.dimension_semantics<parallel>], iteration_bounds = array<i64: 4>, scalar_prefetch = 0 : i64, scratch_operands = 0 : i64, tpu.core_type = #tpu.core_type<tc>, window_params = [{transform_indices = @transform_0, window_bounds = array<i64: 1, 8, 1>}, {transform_indices = @transform_1, window_bounds = array<i64: 1, 8, 4>}, {transform_indices = @transform_2, window_bounds = array<i64: 1, 8, 4>}, {transform_indices = @transform_3, window_bounds = array<i64: 1, 8, 1>}, {pipeline_mode = #tpu.pipeline_mode<synchronous>, transform_indices = @transform_4, window_bounds = array<i64: 208, 256>}, {pipeline_mode = #tpu.pipeline_mode<synchronous>, transform_indices = @transform_5, window_bounds = array<i64: 1, 128>}, {transform_indices = @transform_6, window_bounds = array<i64: 1, 8, 1>}]} {
    %0 = tpu.iota {dimensions = array<i32: 1>} : vector<8x100xi32>
    %c0 = arith.constant 0 : index
    %c0_0 = arith.constant 0 : index
    %c0_1 = arith.constant 0 : index
    %1 = vector.load %arg1[%c0, %c0_0, %c0_1] : memref<1x8x1xi32, #tpu.memory_space<vmem>>, vector<1x8x1xi32>
    %2 = vector.shape_cast %1 : vector<1x8x1xi32> to vector<8x1xi32>
    %3 = vector.broadcast %2 : vector<8x1xi32> to vector<8x100xi32>
    %4 = arith.cmpi eq, %0, %3 : vector<8x100xi32>
    %5 = arith.extui %4 : vector<8x100xi1> to vector<8x100xi32>
    %6 = arith.sitofp %5 : vector<8x100xi32> to vector<8x100xf32>
    %c0_2 = arith.constant 0 : index
    %c0_3 = arith.constant 0 : index
    %c0_4 = arith.constant 0 : index
    %7 = vector.load %arg2[%c0_2, %c0_3, %c0_4] : memref<1x8x4xf32, #tpu.memory_space<vmem>>, vector<1x8x4xf32>
    %8 = vector.shape_cast %7 : vector<1x8x4xf32> to vector<8x4xf32>
    %c0_5 = arith.constant 0 : index
    %c0_6 = arith.constant 0 : index
    %c0_7 = arith.constant 0 : index
    %9 = vector.load %arg3[%c0_5, %c0_6, %c0_7] : memref<1x8x4xf32, #tpu.memory_space<vmem>>, vector<1x8x4xf32>
    %10 = vector.shape_cast %9 : vector<1x8x4xf32> to vector<8x4xf32>
    %c0_8 = arith.constant 0 : index
    %c0_9 = arith.constant 0 : index
    %c0_10 = arith.constant 0 : index
    %11 = vector.load %arg4[%c0_8, %c0_9, %c0_10] : memref<1x8x1xf32, #tpu.memory_space<vmem>>, vector<1x8x1xf32>
    %12 = vector.shape_cast %11 : vector<1x8x1xf32> to vector<8x1xf32>
    %cst = arith.constant 1.000000e+00 : f32
    %13 = vector.broadcast %cst : f32 to vector<8x1xf32>
    %cst_11 = arith.constant 0.000000e+00 : f32
    %14 = vector.broadcast %cst_11 : f32 to vector<8x2xf32>
    %15 = tpu.concatenate %6, %8, %10, %12, %13, %14 in 1 : vector<8x100xf32>, vector<8x4xf32>, vector<8x4xf32>, vector<8x1xf32>, vector<8x1xf32>, vector<8x2xf32> -> vector<8x112xf32>
    %16 = arith.truncf %15 : vector<8x112xf32> to vector<8x112xbf16>
    %c0_12 = arith.constant 0 : index
    %c0_13 = arith.constant 0 : index
    %17 = vector.load %arg5[%c0_12, %c0_13] : memref<208x256xbf16, #tpu.memory_space<vmem>>, vector<112x256xbf16>
    %cst_14 = arith.constant dense<0.000000e+00> : vector<8x256xf32>
    %18 = tpu.matmul %16, %17, %cst_14 {dimension_numbers = #tpu.dot_dimension_numbers<[1], [0], [0], [1], [0, 0, 1, 1], [], []>} : vector<8x112xbf16>, vector<112x256xbf16>, vector<8x256xf32> -> vector<8x256xf32>
    %19 = vector.extract_strided_slice %18 {offsets = [0, 0], sizes = [8, 64], strides = [1, 1]} : vector<8x256xf32> to vector<8x64xf32>
    %cst_15 = arith.constant 5.000000e-01 : f32
    %20 = vector.broadcast %cst_15 : f32 to vector<8x64xf32>
    %21 = arith.mulf %20, %19 : vector<8x64xf32>
    %22 = math.tanh %21 : vector<8x64xf32>
    %cst_16 = arith.constant 5.000000e-01 : f32
    %23 = vector.broadcast %cst_16 : f32 to vector<8x64xf32>
    %24 = arith.mulf %23, %22 : vector<8x64xf32>
    %cst_17 = arith.constant 5.000000e-01 : f32
    %25 = vector.broadcast %cst_17 : f32 to vector<8x64xf32>
    %26 = arith.addf %24, %25 : vector<8x64xf32>
    %27 = vector.extract_strided_slice %18 {offsets = [0, 64], sizes = [8, 64], strides = [1, 1]} : vector<8x256xf32> to vector<8x64xf32>
    %28 = math.tanh %27 : vector<8x64xf32>
    %29 = vector.extract_strided_slice %18 {offsets = [0, 128], sizes = [8, 64], strides = [1, 1]} : vector<8x256xf32> to vector<8x64xf32>
    %cst_18 = arith.constant 5.000000e-01 : f32
    %30 = vector.broadcast %cst_18 : f32 to vector<8x64xf32>
    %31 = arith.mulf %30, %29 : vector<8x64xf32>
    %32 = math.tanh %31 : vector<8x64xf32>
    %cst_19 = arith.constant 5.000000e-01 : f32
    %33 = vector.broadcast %cst_19 : f32 to vector<8x64xf32>
    %34 = arith.mulf %33, %32 : vector<8x64xf32>
    %cst_20 = arith.constant 5.000000e-01 : f32
    %35 = vector.broadcast %cst_20 : f32 to vector<8x64xf32>
    %36 = arith.addf %34, %35 : vector<8x64xf32>
    %37 = arith.mulf %26, %28 : vector<8x64xf32>
    %38 = math.tanh %37 : vector<8x64xf32>
    %39 = arith.mulf %36, %38 : vector<8x64xf32>
    %40 = arith.truncf %39 : vector<8x64xf32> to vector<8x64xbf16>
    %c112 = arith.constant 112 : index
    %c0_21 = arith.constant 0 : index
    %41 = vector.load %arg5[%c112, %c0_21] : memref<208x256xbf16, #tpu.memory_space<vmem>>, vector<64x40xbf16>
    %cst_22 = arith.constant dense<0.000000e+00> : vector<8x40xf32>
    %42 = tpu.matmul %40, %41, %cst_22 {dimension_numbers = #tpu.dot_dimension_numbers<[1], [0], [0], [1], [0, 0, 1, 1], [], []>} : vector<8x64xbf16>, vector<64x40xbf16>, vector<8x40xf32> -> vector<8x40xf32>
    %43 = vector.extract_strided_slice %18 {offsets = [0, 192], sizes = [8, 20], strides = [1, 1]} : vector<8x256xf32> to vector<8x20xf32>
    %44 = vector.extract_strided_slice %42 {offsets = [0, 0], sizes = [8, 20], strides = [1, 1]} : vector<8x40xf32> to vector<8x20xf32>
    %45 = arith.addf %43, %44 : vector<8x20xf32>
    %46 = math.tanh %45 : vector<8x20xf32>
    %47 = arith.truncf %46 : vector<8x20xf32> to vector<8x20xbf16>
    %c176 = arith.constant 176 : index
    %c0_23 = arith.constant 0 : index
    %48 = vector.load %arg5[%c176, %c0_23] : memref<208x256xbf16, #tpu.memory_space<vmem>>, vector<20x20xbf16>
    %cst_24 = arith.constant dense<0.000000e+00> : vector<8x20xf32>
    %49 = tpu.matmul %47, %48, %cst_24 {dimension_numbers = #tpu.dot_dimension_numbers<[1], [0], [0], [1], [0, 0, 1, 1], [], []>} : vector<8x20xbf16>, vector<20x20xbf16>, vector<8x20xf32> -> vector<8x20xf32>
    %50 = vector.extract_strided_slice %18 {offsets = [0, 212], sizes = [8, 20], strides = [1, 1]} : vector<8x256xf32> to vector<8x20xf32>
    %51 = vector.extract_strided_slice %42 {offsets = [0, 20], sizes = [8, 20], strides = [1, 1]} : vector<8x40xf32> to vector<8x20xf32>
    %52 = arith.addf %50, %51 : vector<8x20xf32>
    %53 = arith.addf %52, %49 : vector<8x20xf32>
    %54 = math.tanh %53 : vector<8x20xf32>
    %c0_25 = arith.constant 0 : index
    %c0_26 = arith.constant 0 : index
    %55 = vector.load %arg6[%c0_25, %c0_26] : memref<1x128xf32, #tpu.memory_space<vmem>>, vector<1x20xf32>
    %c0_27 = arith.constant 0 : index
    %c20 = arith.constant 20 : index
    %56 = vector.load %arg6[%c0_27, %c20] : memref<1x128xf32, #tpu.memory_space<vmem>>, vector<1x1xf32>
    %57 = vector.broadcast %55 : vector<1x20xf32> to vector<8x20xf32>
    %58 = arith.mulf %54, %57 : vector<8x20xf32>
    %cst_28 = arith.constant dense<0.000000e+00> : vector<8xf32>
    %59 = vector.multi_reduction <add>, %58, %cst_28 [1] : vector<8x20xf32> to vector<8xf32>
    %60 = vector.shape_cast %59 : vector<8xf32> to vector<8x1xf32>
    %61 = vector.broadcast %56 : vector<1x1xf32> to vector<8x1xf32>
    %62 = arith.addf %60, %61 : vector<8x1xf32>
    %c0_29 = arith.constant 0 : index
    %c0_30 = arith.constant 0 : index
    %c0_31 = arith.constant 0 : index
    %63 = vector.load %arg7[%c0_29, %c0_30, %c0_31] : memref<1x8x1xf32, #tpu.memory_space<vmem>>, vector<1x8x1xf32>
    %64 = vector.shape_cast %63 : vector<1x8x1xf32> to vector<8x1xf32>
    %65 = vector.shape_cast %62 : vector<8x1xf32> to vector<1x8x1xf32>
    tpu.vector_store %arg7[%c0_29, %c0_30, %c0_31], %65 {strides = array<i32>} : memref<1x8x1xf32, #tpu.memory_space<vmem>>, vector<1x8x1xf32>,
    return
  }
  func.func @transform_0(%arg0: i32) -> (i32, i32, i32) {
    %c0_i32 = arith.constant 0 : i32
    %c0_i32_0 = arith.constant 0 : i32
    %c0_i32_1 = arith.constant 0 : i32
    return %arg0, %c0_i32, %c0_i32_0 : i32, i32, i32
  }
  func.func @transform_1(%arg0: i32) -> (i32, i32, i32) {
    %c0_i32 = arith.constant 0 : i32
    %c0_i32_0 = arith.constant 0 : i32
    %c0_i32_1 = arith.constant 0 : i32
    return %arg0, %c0_i32, %c0_i32_0 : i32, i32, i32
  }
  func.func @transform_2(%arg0: i32) -> (i32, i32, i32) {
    %c0_i32 = arith.constant 0 : i32
    %c0_i32_0 = arith.constant 0 : i32
    %c0_i32_1 = arith.constant 0 : i32
    return %arg0, %c0_i32, %c0_i32_0 : i32, i32, i32
  }
  func.func @transform_3(%arg0: i32) -> (i32, i32, i32) {
    %c0_i32 = arith.constant 0 : i32
    %c0_i32_0 = arith.constant 0 : i32
    %c0_i32_1 = arith.constant 0 : i32
    return %arg0, %c0_i32, %c0_i32_0 : i32, i32, i32
  }
  func.func @transform_4(%arg0: i32) -> (i32, i32) {
    %c0_i32 = arith.constant 0 : i32
    %c0_i32_0 = arith.constant 0 : i32
    %c0_i32_1 = arith.constant 0 : i32
    return %c0_i32, %c0_i32_0 : i32, i32
  }
  func.func @transform_5(%arg0: i32) -> (i32, i32) {
    %c0_i32 = arith.constant 0 : i32
    %c0_i32_0 = arith.constant 0 : i32
    %c0_i32_1 = arith.constant 0 : i32
    return %c0_i32, %c0_i32_0 : i32, i32
  }
  func.func @transform_6(%arg0: i32) -> (i32, i32, i32) {
    %c0_i32 = arith.constant 0 : i32
    %c0_i32_0 = arith.constant 0 : i32
    %c0_i32_1 = arith.constant 0 : i32
    return %arg0, %c0_i32, %c0_i32_0 : i32, i32, i32
  }
}

</mosaic_0001>

<llo_original>
// kernel: tpu_custom_call.1
$region0: #{tpu_custom_call.1}
  #allocation0 [shape = 'u32[]', space=smem, size = 0x4, offset = 0x4, fixed_abs, tag = 'smem constant byte address 0x4 - core index']
  #allocation1 [shape = 'u32[144,128]{1,0:T(1,128)}', space=vmem, size = 0x12000, scoped, tag = 'internal scratch']
  %s0 = inlined_call_operand.vmem [shape: s32[4,8,1], index: 0, kind: input, shape index: {}]
  %s1 = inlined_call_operand.vmem [shape: f32[4,8,4], index: 1, kind: input, shape index: {}]
  %s2 = inlined_call_operand.vmem [shape: f32[4,8,4], index: 2, kind: input, shape index: {}]
  %s3 = inlined_call_operand.vmem [shape: f32[4,8,1], index: 3, kind: input, shape index: {}]
  %s4 = inlined_call_operand.hbm [shape: bf16[208,256], index: 4, kind: input, shape index: {}]
  %s5 = inlined_call_operand.vmem [shape: f32[1,128], index: 5, kind: input, shape index: {}]
  %s6 = inlined_call_operand.vmem [shape: f32[4,8,1], index: 6, kind: output, shape index: {}]
  %s7 = sld [smem:[#allocation0]]
  $region61: #{tpu_custom_call.1} parent=0
    _
  %s9 = ssub.s32 1, %s7
  %s10 = scalar_select 0, %s9, %s7
  $region1: #{tpu_custom_call.1} parent=0
    #allocation2 [shape = 'u8[106496]{0}', space=vmem, size = 0x1a000, scoped, tag = 'input window, operand 4, single buffered']
    #allocation3 [shape = 's32[2]{0}', space=sflag, size = 0x8, scoped, tag = 'scoped memory for tpu_custom_call.1']
    %11 = vsyncpa [#allocation3], 0
    loop: start=0, step=1, limit=6
    $region2: #{tpu_custom_call.1} parent=1 // loop_pre_header
      _
    $region3: #{tpu_custom_call.1} parent=1 // loop_header
      %s13 = sphi 0, %s17
      %p14 = scmp.ge.s32.totalorder %s13, 6
      %s23 = sphi 0, %s25
      %s26 = sphi 0, %s23
      %s27 = sphi 0, %s26
      %s43 = sphi 0, %s27
      %s49 = sphi 0, %s51
      %s52 = sphi 0, %s49
      %s53 = sphi 0, %s52
      %s69 = sphi 0, %s53
      %s75 = sphi 0, %s77
      %s78 = sphi 0, %s75
      %s79 = sphi 0, %s78
      %s95 = sphi 0, %s79
      %s101 = sphi 0, %s103
      %s104 = sphi 0, %s101
      %s105 = sphi 0, %s104
      %s121 = sphi 0, %s105
      %s125 = sphi 0, %s125
      %s127 = sphi 0, %s125
      %s128 = sphi 0, %s127
      %s142 = sphi 0, %s128
      %s146 = sphi 0, %s146
      %s148 = sphi 0, %s146
      %s149 = sphi 0, %s148
      %s163 = sphi 0, %s149
      %s169 = sphi 0, %s171
      %s172 = sphi 0, %s169
      %s173 = sphi 0, %s172
      %s189 = sphi 0, %s173
    $region4: #{tpu_custom_call.1} parent=1 // loop_header_branch
      %16 = sbr.rel (%p14) target = $region8
    $region5: #{tpu_custom_call.1} parent=1 // loop_body
      %s18 = ssub.s32 %s13, 1
      %s19 = ssub.s32 %s13, 2
      %s20 = sadd.s32 %s13, 1
      %s21 = ssub.s32 %s13, %s20
      %p22 = scmp.eq.s32.totalorder %s21, 0
      %s24 = sadd.s32 %s23, 1
      %s25 = scalar_select %p22, %s23, %s24
      %p28 = pneg %p22
      %p29 = scmp.eq.s32.totalorder %s13, 3
      %p30 = por %p28, %p29
      %p31 = scmp.ne.s32.totalorder %s23, %s26
      %p32 = scmp.eq.s32.totalorder %s13, 0
      %p33 = por %p31, %p32
      %p34 = scmp.ne.s32.totalorder %s23, %s26
      %p35 = scmp.eq.s32.totalorder %s18, 3
      %p36 = por %p34, %p35
      %p37 = scmp.ne.s32.totalorder %s26, %s27
      %p38 = scmp.eq.s32.totalorder %s18, 0
      %p39 = por %p37, %p38
      %p40 = scmp.ne.s32.totalorder %s26, %s27
      %p41 = scmp.eq.s32.totalorder %s19, 3
      %p42 = por %p40, %p41
      %p44 = scmp.ne.s32.totalorder %s27, %s43
      %p45 = scmp.eq.s32.totalorder %s19, 0
      %p46 = por %p44, %p45
      %s47 = ssub.s32 %s13, %s20
      %p48 = scmp.eq.s32.totalorder %s47, 0
      %s50 = sadd.s32 %s49, 1
      %s51 = scalar_select %p48, %s49, %s50
      %p54 = pneg %p48
      %p55 = scmp.eq.s32.totalorder %s13, 3
      %p56 = por %p54, %p55
      %p57 = scmp.ne.s32.totalorder %s49, %s52
      %p58 = scmp.eq.s32.totalorder %s13, 0
      %p59 = por %p57, %p58
      %p60 = scmp.ne.s32.totalorder %s49, %s52
      %p61 = scmp.eq.s32.totalorder %s18, 3
      %p62 = por %p60, %p61
      %p63 = scmp.ne.s32.totalorder %s52, %s53
      %p64 = scmp.eq.s32.totalorder %s18, 0
      %p65 = por %p63, %p64
      %p66 = scmp.ne.s32.totalorder %s52, %s53
      %p67 = scmp.eq.s32.totalorder %s19, 3
      %p68 = por %p66, %p67
      %p70 = scmp.ne.s32.totalorder %s53, %s69
      %p71 = scmp.eq.s32.totalorder %s19, 0
      %p72 = por %p70, %p71
      %s73 = ssub.s32 %s13, %s20
      %p74 = scmp.eq.s32.totalorder %s73, 0
      %s76 = sadd.s32 %s75, 1
      %s77 = scalar_select %p74, %s75, %s76
      %p80 = pneg %p74
      %p81 = scmp.eq.s32.totalorder %s13, 3
      %p82 = por %p80, %p81
      %p83 = scmp.ne.s32.totalorder %s75, %s78
      %p84 = scmp.eq.s32.totalorder %s13, 0
      %p85 = por %p83, %p84
      %p86 = scmp.ne.s32.totalorder %s75, %s78
      %p87 = scmp.eq.s32.totalorder %s18, 3
      %p88 = por %p86, %p87
      %p89 = scmp.ne.s32.totalorder %s78, %s79
      %p90 = scmp.eq.s32.totalorder %s18, 0
      %p91 = por %p89, %p90
      %p92 = scmp.ne.s32.totalorder %s78, %s79
      %p93 = scmp.eq.s32.totalorder %s19, 3
      %p94 = por %p92, %p93
      %p96 = scmp.ne.s32.totalorder %s79, %s95
      %p97 = scmp.eq.s32.totalorder %s19, 0
      %p98 = por %p96, %p97
      %s99 = ssub.s32 %s13, %s20
      %p100 = scmp.eq.s32.totalorder %s99, 0
      %s102 = sadd.s32 %s101, 1
      %s103 = scalar_select %p100, %s101, %s102
      %p106 = pneg %p100
      %p107 = scmp.eq.s32.totalorder %s13, 3
      %p108 = por %p106, %p107
      %p109 = scmp.ne.s32.totalorder %s101, %s104
      %p110 = scmp.eq.s32.totalorder %s13, 0
      %p111 = por %p109, %p110
      %p112 = scmp.ne.s32.totalorder %s101, %s104
      %p113 = scmp.eq.s32.totalorder %s18, 3
      %p114 = por %p112, %p113
      %p115 = scmp.ne.s32.totalorder %s104, %s105
      %p116 = scmp.eq.s32.totalorder %s18, 0
      %p117 = por %p115, %p116
      %p118 = scmp.ne.s32.totalorder %s104, %s105
      %p119 = scmp.eq.s32.totalorder %s19, 3
      %p120 = por %p118, %p119
      %p122 = scmp.ne.s32.totalorder %s105, %s121
      %p123 = scmp.eq.s32.totalorder %s19, 0
      %p124 = por %p122, %p123
      %s126 = sadd.s32 %s125, 1
      %p129 = scmp.eq.s32.totalorder %s13, 3
      %p130 = scmp.ne.s32.totalorder %s125, %s127
      %p131 = scmp.eq.s32.totalorder %s13, 0
      %p132 = por %p130, %p131
      %p133 = scmp.ne.s32.totalorder %s125, %s127
      %p134 = scmp.eq.s32.totalorder %s18, 3
      %p135 = por %p133, %p134
      %p136 = scmp.ne.s32.totalorder %s127, %s128
      %p137 = scmp.eq.s32.totalorder %s18, 0
      %p138 = por %p136, %p137
      %p139 = scmp.ne.s32.totalorder %s127, %s128
      %p140 = scmp.eq.s32.totalorder %s19, 3
      %p141 = por %p139, %p140
      %p143 = scmp.ne.s32.totalorder %s128, %s142
      %p144 = scmp.eq.s32.totalorder %s19, 0
      %p145 = por %p143, %p144
      %s147 = sadd.s32 %s146, 1
      %p150 = scmp.eq.s32.totalorder %s13, 3
      %p151 = scmp.ne.s32.totalorder %s146, %s148
      %p152 = scmp.eq.s32.totalorder %s13, 0
      %p153 = por %p151, %p152
      %p154 = scmp.ne.s32.totalorder %s146, %s148
      %p155 = scmp.eq.s32.totalorder %s18, 3
      %p156 = por %p154, %p155
      %p157 = scmp.ne.s32.totalorder %s148, %s149
      %p158 = scmp.eq.s32.totalorder %s18, 0
      %p159 = por %p157, %p158
      %p160 = scmp.ne.s32.totalorder %s148, %s149
      %p161 = scmp.eq.s32.totalorder %s19, 3
      %p162 = por %p160, %p161
      %p164 = scmp.ne.s32.totalorder %s149, %s163
      %p165 = scmp.eq.s32.totalorder %s19, 0
      %p166 = por %p164, %p165
      %s167 = ssub.s32 %s13, %s20
      %p168 = scmp.eq.s32.totalorder %s167, 0
      %s170 = sadd.s32 %s169, 1
      %s171 = scalar_select %p168, %s169, %s170
      %p174 = pneg %p168
      %p175 = scmp.eq.s32.totalorder %s13, 3
      %p176 = por %p174, %p175
      %p177 = scmp.ne.s32.totalorder %s169, %s172
      %p178 = scmp.eq.s32.totalorder %s13, 0
      %p179 = por %p177, %p178
      %p180 = scmp.ne.s32.totalorder %s169, %s172
      %p181 = scmp.eq.s32.totalorder %s18, 3
      %p182 = por %p180, %p181
      %p183 = scmp.ne.s32.totalorder %s172, %s173
      %p184 = scmp.eq.s32.totalorder %s18, 0
      %p185 = por %p183, %p184
      %p186 = scmp.ne.s32.totalorder %s172, %s173
      %p187 = scmp.eq.s32.totalorder %s19, 3
      %p188 = por %p186, %p187
      %p190 = scmp.ne.s32.totalorder %s173, %s189
      %p191 = scmp.eq.s32.totalorder %s19, 0
      %p192 = por %p190, %p191
      %p193 = scmp.le.s32.totalorder 1, %s13
      %p194 = scmp.lt.s32.totalorder %s13, 5
      %p195 = pnand %p193, %p194
      %p196 = pneg %p195
      // Predicated region
      $region9: #{tpu_custom_call.1} parent=5 // pred_check
        _
      $region10: #{tpu_custom_call.1} parent=5 // pred_check_branch
        %198 = sbr.rel (%p195) target = $region12
      $region11: #{tpu_custom_call.1} parent=5 // pred_region
        %s199 = ssub.s32 %s13, 1
        // Predicated region
        $region13: #{tpu_custom_call.1} parent=11 // pred_check
          %p200 = pneg %p138
        $region14: #{tpu_custom_call.1} parent=11 // pred_check_branch
          %202 = sbr.rel (%p200) target = $region16
        $region15: #{tpu_custom_call.1} parent=11 // pred_region
          %s204 = ssub.s32 3328, 3328
          %205 = vsyncadd [#allocation3], %s204
          %s206 = sshll.u32 [#allocation2], 4
          %s207 = int_to_ptr.vmem [resolvable:$true] %s206
          %212 = dma.hbm_to_vmem [thread:$0]  %s4, 3328, %s207, [#allocation3], 128, 128, 8
        $region16: #{tpu_custom_call.1} parent=11 // pred_fallthru
          _
        // Predicated region
        $region17: #{tpu_custom_call.1} parent=11 // pred_check
          %p213 = pneg %p159
        $region18: #{tpu_custom_call.1} parent=11 // pred_check_branch
          %215 = sbr.rel (%p213) target = $region20
        $region19: #{tpu_custom_call.1} parent=11 // pred_region
          _
        $region20: #{tpu_custom_call.1} parent=11 // pred_fallthru
          _
      $region12: #{tpu_custom_call.1} parent=5 // pred_fallthru
        _
      %p216 = scmp.lt.s32.totalorder %s13, 4
      // Predicated region
      $region21: #{tpu_custom_call.1} parent=5 // pred_check
        %p217 = pneg %p216
      $region22: #{tpu_custom_call.1} parent=5 // pred_check_branch
        %219 = sbr.rel (%p217) target = $region24
      $region23: #{tpu_custom_call.1} parent=5 // pred_region
        // Predicated region
        $region25: #{tpu_custom_call.1} parent=23 // pred_check
          %p220 = pneg %p33
        $region26: #{tpu_custom_call.1} parent=23 // pred_check_branch
          %222 = sbr.rel (%p220) target = $region28
        $region27: #{tpu_custom_call.1} parent=23 // pred_region
          %p223 = scmp.lt.s32.totalorder %s13, 3
          %s224 = scalar_select %p223, %s13, 3
          %s225 = smul.addr %s224, 8
          %s226 = scalar_lea.vmem %s0, %s225
        $region28: #{tpu_custom_call.1} parent=23 // pred_fallthru
          _
        // Predicated region
        $region29: #{tpu_custom_call.1} parent=23 // pred_check
          %p227 = pneg %p59
        $region30: #{tpu_custom_call.1} parent=23 // pred_check_branch
          %229 = sbr.rel (%p227) target = $region32
        $region31: #{tpu_custom_call.1} parent=23 // pred_region
          %p230 = scmp.lt.s32.totalorder %s13, 3
          %s231 = scalar_select %p230, %s13, 3
          %s232 = smul.addr %s231, 8
          %s233 = scalar_lea.vmem %s1, %s232
        $region32: #{tpu_custom_call.1} parent=23 // pred_fallthru
          _
        // Predicated region
        $region33: #{tpu_custom_call.1} parent=23 // pred_check
          %p234 = pneg %p85
        $region34: #{tpu_custom_call.1} parent=23 // pred_check_branch
          %236 = sbr.rel (%p234) target = $region36
        $region35: #{tpu_custom_call.1} parent=23 // pred_region
          %p237 = scmp.lt.s32.totalorder %s13, 3
          %s238 = scalar_select %p237, %s13, 3
          %s239 = smul.addr %s238, 8
          %s240 = scalar_lea.vmem %s2, %s239
        $region36: #{tpu_custom_call.1} parent=23 // pred_fallthru
          _
        // Predicated region
        $region37: #{tpu_custom_call.1} parent=23 // pred_check
          %p241 = pneg %p111
        $region38: #{tpu_custom_call.1} parent=23 // pred_check_branch
          %243 = sbr.rel (%p241) target = $region40
        $region39: #{tpu_custom_call.1} parent=23 // pred_region
          %p244 = scmp.lt.s32.totalorder %s13, 3
          %s245 = scalar_select %p244, %s13, 3
          %s246 = smul.addr %s245, 8
          %s247 = scalar_lea.vmem %s3, %s246
        $region40: #{tpu_custom_call.1} parent=23 // pred_fallthru
          _
      $region24: #{tpu_custom_call.1} parent=5 // pred_fallthru
        _
      %p248 = scmp.le.s32.totalorder 1, %s13
      %p249 = scmp.lt.s32.totalorder %s13, 5
      %p250 = pnand %p248, %p249
      %p251 = pneg %p250
      // Predicated region
      $region41: #{tpu_custom_call.1} parent=5 // pred_check
        _
      $region42: #{tpu_custom_call.1} parent=5 // pred_check_branch
        %253 = sbr.rel (%p250) target = $region44
      $region43: #{tpu_custom_call.1} parent=5 // pred_region
        %s254 = ssub.s32 %s13, 1
        // Predicated region
        $region45: #{tpu_custom_call.1} parent=43 // pred_check
          %p255 = pneg %p138
        $region46: #{tpu_custom_call.1} parent=43 // pred_check_branch
          %257 = sbr.rel (%p255) target = $region48
        $region47: #{tpu_custom_call.1} parent=43 // pred_region
          %258 = dma.done [#allocation3], 3328
        $region48: #{tpu_custom_call.1} parent=43 // pred_fallthru
          _
        %p259 = scmp.lt.s32.totalorder %s18, 3
        %s260 = scalar_select %p259, %s18, 3
        %s261 = smul.addr %s260, 8
        %s262 = scalar_lea.vmem %s0, %s261
        %p263 = pneg %p39
        %p264 = pneg %p36
        %p265 = scmp.lt.s32.totalorder %s18, 3
        %s266 = scalar_select %p265, %s18, 3
        %s267 = smul.addr %s266, 8
        %s268 = scalar_lea.vmem %s1, %s267
        %p269 = pneg %p65
        %p270 = pneg %p62
        %p271 = scmp.lt.s32.totalorder %s18, 3
        %s272 = scalar_select %p271, %s18, 3
        %s273 = smul.addr %s272, 8
        %s274 = scalar_lea.vmem %s2, %s273
        %p275 = pneg %p91
        %p276 = pneg %p88
        %p277 = scmp.lt.s32.totalorder %s18, 3
        %s278 = scalar_select %p277, %s18, 3
        %s279 = smul.addr %s278, 8
        %s280 = scalar_lea.vmem %s3, %s279
        %p281 = pneg %p117
        %p282 = pneg %p114
        %p283 = pneg %p138
        %p284 = pneg %p135
        %p285 = pneg %p159
        %p286 = pneg %p156
        %p287 = pneg %p185
        %p288 = pneg %p182
        %p289 = scmp.lt.s32.totalorder %s18, 3
        %s290 = scalar_select %p289, %s18, 3
        %s291 = smul.addr %s290, 8
        %s292 = scalar_lea.vmem %s6, %s291
        %p293 = scmp.lt.s32.totalorder %s18, 3
        %s294 = scalar_select %p293, %s18, 3
        %s295 = smul.addr %s294, 8
        %s296 = scalar_lea.vmem %s0, %s295
        %p297 = scmp.lt.s32.totalorder %s18, 3
        %s298 = scalar_select %p297, %s18, 3
        %s299 = smul.addr %s298, 8
        %s300 = scalar_lea.vmem %s1, %s299
        %p301 = scmp.lt.s32.totalorder %s18, 3
        %s302 = scalar_select %p301, %s18, 3
        %s303 = smul.addr %s302, 8
        %s304 = scalar_lea.vmem %s2, %s303
        %p305 = scmp.lt.s32.totalorder %s18, 3
        %s306 = scalar_select %p305, %s18, 3
        %s307 = smul.addr %s306, 8
        %s308 = scalar_lea.vmem %s3, %s307
        %p309 = scmp.lt.s32.totalorder %s18, 3
        %s310 = scalar_select %p309, %s18, 3
        %s311 = smul.addr %s310, 8
        %s312 = scalar_lea.vmem %s6, %s311
        %v314 = vlaneseq
        %v315 = vand.u32 %v314, 127
        %v316 = vld [vmem:[%s296] sm:$0xff]
        %317 = vset.pattern.permute.xlu0 0
        %318 = vperm.xlu0 %317, %v316
        %v319 = vpop.permute.xlu0 %318
        %vm320 = vcmp.eq.s32.totalorder %v315, %v319
        %v321 = vsel %vm320, 1, 0
        %v322 = vcvt.s32.f32 %v321
        %v323 = vld [vmem:[%s300] sm:$0xff]
        %v324 = vld [vmem:[%s304] sm:$0xff]
        %v325 = vld [vmem:[%s308] sm:$0xff]
        %327 = vrot.lane.b32.xlu0 %v323, 100
        %v328 = vpop.permute.xlu0 %327
        %331 = vrot.lane.b32.xlu0 %v324, 104
        %v332 = vpop.permute.xlu0 %331
        %335 = vrot.lane.b32.xlu0 %v325, 108
        %v336 = vpop.permute.xlu0 %335
        %vm338 = vcmask 818176
        %v339 = vsel %vm338, %v322, %v328
        %vm340 = vcmask 850944
        %v341 = vsel %vm340, %v339, %v332
        %vm342 = vcmask 883712
        %v343 = vsel %vm342, %v341, %v336
        %vm344 = vcmask 891904
        %v345 = vsel %vm344, %v343, 1.0
        %vm346 = vcmask 900096
        %v347 = vsel %vm346, %v345, 0.0
        %v348 = vpack.c.bf16 %v347, %v347
        %v349 = vld [vmem:[#allocation2] sm:$0xff]
        %v350 = vld [vmem:[#allocation2 + $0x8] sm:$0xff]
        %v351 = vld [vmem:[#allocation2 + $0x10] sm:$0xff]
        %v352 = vld [vmem:[#allocation2 + $0x18] sm:$0xff]
        %v353 = vld [vmem:[#allocation2 + $0x20] sm:$0xff]
        %v354 = vld [vmem:[#allocation2 + $0x28] sm:$0xff]
        %v355 = vld [vmem:[#allocation2 + $0x30] sm:$0xff]
        %v356 = vld [vmem:[#allocation2 + $0x38] sm:$0xff]
        %v357 = vld [vmem:[#allocation2 + $0x40] sm:$0xff]
        %v358 = vld [vmem:[#allocation2 + $0x48] sm:$0xff]
        %v359 = vld [vmem:[#allocation2 + $0x50] sm:$0xff]
        %v360 = vld [vmem:[#allocation2 + $0x58] sm:$0xff]
        %v361 = vld [vmem:[#allocation2 + $0x60] sm:$0xff]
        %v362 = vld [vmem:[#allocation2 + $0x68] sm:$0xff]
        %v377 = vunpack.c.l.b16 %v349
        %v378 = vunpack.c.h.b16 %v349
        %v379 = vunpack.c.l.b16 %v350
        %v380 = vunpack.c.h.b16 %v350
        %v381 = vunpack.c.l.b16 %v351
        %v382 = vunpack.c.h.b16 %v351
        %v383 = vunpack.c.l.b16 %v352
        %v384 = vunpack.c.h.b16 %v352
        %v385 = vunpack.c.l.b16 %v353
        %v386 = vunpack.c.h.b16 %v353
        %v387 = vunpack.c.l.b16 %v354
        %v388 = vunpack.c.h.b16 %v354
        %v389 = vunpack.c.l.b16 %v355
        %v390 = vunpack.c.h.b16 %v355
        %v391 = vunpack.c.l.b16 %v356
        %v392 = vunpack.c.h.b16 %v356
        %v393 = vunpack.c.l.b16 %v357
        %v394 = vunpack.c.h.b16 %v357
        %v395 = vunpack.c.l.b16 %v358
        %v396 = vunpack.c.h.b16 %v358
        %v397 = vunpack.c.l.b16 %v359
        %v398 = vunpack.c.h.b16 %v359
        %v399 = vunpack.c.l.b16 %v360
        %v400 = vunpack.c.h.b16 %v360
        %v401 = vunpack.c.l.b16 %v361
        %v402 = vunpack.c.h.b16 %v361
        %v403 = vunpack.c.l.b16 %v362
        %v404 = vunpack.c.h.b16 %v362
        %v405 = vpack.c.b16 %v379, %v377
        %v406 = vpack.c.b16 %v380, %v378
        %v407 = vpack.c.b16 %v383, %v381
        %v408 = vpack.c.b16 %v384, %v382
        %v409 = vpack.c.b16 %v387, %v385
        %v410 = vpack.c.b16 %v388, %v386
        %v411 = vpack.c.b16 %v391, %v389
        %v412 = vpack.c.b16 %v392, %v390
        %v413 = vpack.c.b16 %v395, %v393
        %v414 = vpack.c.b16 %v396, %v394
        %v415 = vpack.c.b16 %v399, %v397
        %v416 = vpack.c.b16 %v400, %v398
        %v417 = vpack.c.b16 %v403, %v401
        %v418 = vpack.c.b16 %v404, %v402
        %vm433 = vcmask 916480
        %v435 = vsel %vm433, %v348, 0
        %437 = vmatprep.subr.bf16.mxu0 0
        %438 = vmatpush1.bf16.msra.mxu0 0
        %439 = vmatprep.subr.bf16.mxu0 %v418
        %440 = vmatpush1.bf16.msra.mxu0 %v417
        %441 = vmatprep.subr.bf16.mxu0 %v416
        %442 = vmatpush1.bf16.msra.mxu0 %v415
        %443 = vmatprep.subr.bf16.mxu0 %v414
        %444 = vmatpush1.bf16.msra.mxu0 %v413
        %445 = vmatprep.subr.bf16.mxu0 %v412
        %446 = vmatpush1.bf16.msra.mxu0 %v411
        %447 = vmatprep.subr.bf16.mxu0 %v410
        %448 = vmatpush1.bf16.msra.mxu0 %v409
        %449 = vmatprep.subr.bf16.mxu0 %v408
        %450 = vmatpush1.bf16.msra.mxu0 %v407
        %451 = vmatprep.subr.bf16.mxu0 %v406
        %452 = vmatpush1.bf16.msra.mxu0 %v405
        %453 = vmatprep.subr.bf16.mxu0 0
        %454 = vmatpush2.bf16.msra.mxu0 0
        %455 = vmatprep.subr.bf16.mxu0 0
        %456 = vmatpush2.bf16.msra.mxu0 0
        %457 = vmatprep.subr.bf16.mxu0 0
        %458 = vmatpush2.bf16.msra.mxu0 0
        %459 = vmatprep.subr.bf16.mxu0 0
        %460 = vmatpush2.bf16.msra.mxu0 0
        %461 = vmatprep.subr.bf16.mxu0 0
        %462 = vmatpush2.bf16.msra.mxu0 0
        %463 = vmatprep.subr.bf16.mxu0 0
        %464 = vmatpush2.bf16.msra.mxu0 0
        %465 = vmatprep.subr.bf16.mxu0 0
        %466 = vmatpush2.bf16.msra.mxu0 0
        %467 = vmatprep.subr.bf16.mxu0 0
        %468 = vmatpush2.bf16.msra.mxu0 0
        %469 = vmatprep.mubr.bf16.mxu0 0
        %470 = vmatmul.mubr.bf16.gmra.mxu0 %v435
        %v471 = vpop.f32.mrf.mxu0
        %v472 = vadd.f32 0.0, %v471
        %v473 = vpop.f32.mrf.mxu0
        %v474 = vadd.f32 0.0, %v473
        %v475 = vpop.f32.mrf.mxu0
        %v476 = vpop.f32.mrf.mxu0
        %477 = vdwg.mxu0
        %v478 = vmul.f32 %v472, 0.5
        %v479 = vtanh.pop %v478
        %v480 = vmul.f32 %v479, 0.5
        %v481 = vadd.f32 %v480, 0.5
        %v482 = vtanh.pop %v472
        %v483 = vmul.f32 %v474, 0.5
        %v484 = vtanh.pop %v483
        %v485 = vmul.f32 %v484, 0.5
        %v486 = vadd.f32 %v485, 0.5
        %488 = vrot.lane.b32.xlu0 %v482, 64
        %v489 = vpop.permute.xlu0 %488
        %v491 = vmul.f32 %v481, %v489
        %v492 = vtanh.pop %v491
        %v493 = vmul.f32 %v486, %v492
        %v494 = vpack.c.bf16 %v493, %v493
        %v495 = vld [vmem:[#allocation2 + $0x70] sm:$0xf]
        %v496 = vld [vmem:[#allocation2 + $0x78] sm:$0xf]
        %v497 = vld [vmem:[#allocation2 + $0x80] sm:$0xf]
        %v498 = vld [vmem:[#allocation2 + $0x88] sm:$0xf]
        %v499 = vld [vmem:[#allocation2 + $0x90] sm:$0xf]
        %v500 = vld [vmem:[#allocation2 + $0x98] sm:$0xf]
        %v501 = vld [vmem:[#allocation2 + $0xa0] sm:$0xf]
        %v502 = vld [vmem:[#allocation2 + $0xa8] sm:$0xf]
        %v511 = vunpack.c.l.b16 %v495
        %v512 = vunpack.c.l.b16 %v496
        %v513 = vunpack.c.l.b16 %v497
        %v514 = vunpack.c.l.b16 %v498
        %v515 = vunpack.c.l.b16 %v499
        %v516 = vunpack.c.l.b16 %v500
        %v517 = vunpack.c.l.b16 %v501
        %v518 = vunpack.c.l.b16 %v502
        %v519 = vpack.c.b16 %v512, %v511
        %v520 = vpack.c.b16 %v514, %v513
        %v521 = vpack.c.b16 %v516, %v515
        %v522 = vpack.c.b16 %v518, %v517
        %vm527 = vcmask 523264
        %v529 = vsel %vm527, %v494, 0
        %531 = vmatprep.subr.bf16.mxu0 0
        %532 = vmatpush1.bf16.msra.mxu0 0
        %533 = vmatprep.subr.bf16.mxu0 0
        %534 = vmatpush1.bf16.msra.mxu0 0
        %535 = vmatprep.subr.bf16.mxu0 0
        %536 = vmatpush1.bf16.msra.mxu0 0
        %537 = vmatprep.subr.bf16.mxu0 0
        %538 = vmatpush1.bf16.msra.mxu0 0
        %539 = vmatprep.subr.bf16.mxu0 0
        %540 = vmatpush1.bf16.msra.mxu0 %v522
        %541 = vmatprep.subr.bf16.mxu0 0
        %542 = vmatpush1.bf16.msra.mxu0 %v521
        %543 = vmatprep.subr.bf16.mxu0 0
        %544 = vmatpush1.bf16.msra.mxu0 %v520
        %545 = vmatprep.subr.bf16.mxu0 0
        %546 = vmatpush1.bf16.msra.mxu0 %v519
        %547 = vmatprep.subr.bf16.mxu0 0
        %548 = vmatpush2.bf16.msra.mxu0 0
        %549 = vmatprep.subr.bf16.mxu0 0
        %550 = vmatpush2.bf16.msra.mxu0 0
        %551 = vmatprep.subr.bf16.mxu0 0
        %552 = vmatpush2.bf16.msra.mxu0 0
        %553 = vmatprep.subr.bf16.mxu0 0
        %554 = vmatpush2.bf16.msra.mxu0 0
        %555 = vmatprep.subr.bf16.mxu0 0
        %556 = vmatpush2.bf16.msra.mxu0 0
        %557 = vmatprep.subr.bf16.mxu0 0
        %558 = vmatpush2.bf16.msra.mxu0 0
        %559 = vmatprep.subr.bf16.mxu0 0
        %560 = vmatpush2.bf16.msra.mxu0 0
        %561 = vmatprep.subr.bf16.mxu0 0
        %562 = vmatpush2.bf16.msra.mxu0 0
        %563 = vmatprep.mubr.bf16.mxu0 0
        %564 = vmatmul.mubr.bf16.gmra.mxu0 %v529
        %v565 = vpop.f32.mrf.mxu0
        %v566 = vadd.f32 0.0, %v565
        %v567 = vpop.f32.mrf.mxu0
        %v568 = vpop.f32.mrf.mxu0
        %v569 = vpop.f32.mrf.mxu0
        %570 = vdwg.mxu0
        %572 = vrot.lane.b32.xlu0 %v566, 64
        %v573 = vpop.permute.xlu0 %572
        %v575 = vadd.f32 %v474, %v573
        %v576 = vtanh.pop %v575
        %v577 = vpack.c.bf16 %v576, %v576
        %v578 = vld [vmem:[#allocation2 + $0xb0] sm:$0xf]
        %v579 = vld [vmem:[#allocation2 + $0xb8] sm:$0xf]
        %v580 = vld [vmem:[#allocation2 + $0xc0] sm:$0x3]
        %582 = vrot.lane.b32.xlu0 %v577, 64
        %v583 = vpop.permute.xlu0 %582
        %v587 = vunpack.c.l.b16 %v578
        %v588 = vunpack.c.l.b16 %v579
        %v589 = vunpack.c.l.b16 %v580
        %v590 = vpack.c.b16 %v588, %v587
        %v591 = vpack.c.b16 %v589, %v589
        %vm593 = vcmask 162816
        %v595 = vsel %vm593, %v583, 0
        %vm597 = vcmask 1041408
        %v599 = vsel %vm597, %v591, 0
        %601 = vmatprep.subr.bf16.mxu0 0
        %602 = vmatpush1.bf16.msra.mxu0 0
        %603 = vmatprep.subr.bf16.mxu0 0
        %604 = vmatpush1.bf16.msra.mxu0 0
        %605 = vmatprep.subr.bf16.mxu0 0
        %606 = vmatpush1.bf16.msra.mxu0 0
        %607 = vmatprep.subr.bf16.mxu0 0
        %608 = vmatpush1.bf16.msra.mxu0 0
        %609 = vmatprep.subr.bf16.mxu0 0
        %610 = vmatpush1.bf16.msra.mxu0 0
        %611 = vmatprep.subr.bf16.mxu0 0
        %612 = vmatpush1.bf16.msra.mxu0 0
        %613 = vmatprep.subr.bf16.mxu0 0
        %614 = vmatpush1.bf16.msra.mxu0 %v599
        %615 = vmatprep.subr.bf16.mxu0 0
        %616 = vmatpush1.bf16.msra.mxu0 %v590
        %617 = vmatprep.subr.bf16.mxu0 0
        %618 = vmatpush2.bf16.msra.mxu0 0
        %619 = vmatprep.subr.bf16.mxu0 0
        %620 = vmatpush2.bf16.msra.mxu0 0
        %621 = vmatprep.subr.bf16.mxu0 0
        %622 = vmatpush2.bf16.msra.mxu0 0
        %623 = vmatprep.subr.bf16.mxu0 0
        %624 = vmatpush2.bf16.msra.mxu0 0
        %625 = vmatprep.subr.bf16.mxu0 0
        %626 = vmatpush2.bf16.msra.mxu0 0
        %627 = vmatprep.subr.bf16.mxu0 0
        %628 = vmatpush2.bf16.msra.mxu0 0
        %629 = vmatprep.subr.bf16.mxu0 0
        %630 = vmatpush2.bf16.msra.mxu0 0
        %631 = vmatprep.subr.bf16.mxu0 0
        %632 = vmatpush2.bf16.msra.mxu0 0
        %633 = vmatprep.mubr.bf16.mxu0 0
        %634 = vmatmul.mubr.bf16.gmra.mxu0 %v595
        %v635 = vpop.f32.mrf.mxu0
        %v636 = vadd.f32 0.0, %v635
        %v637 = vpop.f32.mrf.mxu0
        %v638 = vpop.f32.mrf.mxu0
        %v639 = vpop.f32.mrf.mxu0
        %640 = vdwg.mxu0
        %642 = vrot.lane.b32.xlu0 %v636, 84
        %v643 = vpop.permute.xlu0 %642
        %v645 = vadd.f32 %v575, %v643
        %v646 = vtanh.pop %v645
        %v647 = vld [vmem:[%s5] sm:$0x1]
        %v649 = vlaneseq
        %v650 = vshrl.u32 %v649, 7
        %v651 = vsub.s32 0, %v650
        %v652 = vrot.slane %v647, %v651
        %653 = vrot.lane.b32.xlu0 %v652, 84
        %v654 = vpop.permute.xlu0 %653
        %v656 = vmul.f32 %v646, %v654
        %658 = vrot.lane.b32.xlu0 %v656, 44
        %v659 = vpop.permute.xlu0 %658
        %v661 = vsel %vm593, %v659, 0.0
        %662 = vadd.xlane.f32.xlu0 %v661
        %v663 = vpop.xlane.xlu0 %662
        %v665 = vadd.f32 %v663, %v652
        %667 = vrot.lane.b32.xlu0 %v665, 108
        %v668 = vpop.permute.xlu0 %667
        %vm670 = vcmask 7168
        %671 = vst.msk [vmem:[%s312] sm:$0xff] %vm670, %v668
        %p672 = scmp.lt.s32.totalorder %s18, 3
        %s673 = scalar_select %p672, %s18, 3
        %s674 = smul.addr %s673, 8
        %s675 = scalar_lea.vmem %s6, %s674
        // Predicated region
        $region49: #{tpu_custom_call.1} parent=43 // pred_check
          %p676 = pneg %p182
        $region50: #{tpu_custom_call.1} parent=43 // pred_check_branch
          %678 = sbr.rel (%p676) target = $region52
        $region51: #{tpu_custom_call.1} parent=43 // pred_region
          _
        $region52: #{tpu_custom_call.1} parent=43 // pred_fallthru
          _
      $region44: #{tpu_custom_call.1} parent=5 // pred_fallthru
        _
      %p679 = scmp.le.s32.totalorder 2, %s13
      // Predicated region
      $region53: #{tpu_custom_call.1} parent=5 // pred_check
        %p680 = pneg %p679
      $region54: #{tpu_custom_call.1} parent=5 // pred_check_branch
        %682 = sbr.rel (%p680) target = $region56
      $region55: #{tpu_custom_call.1} parent=5 // pred_region
        %s683 = ssub.s32 %s13, 2
        // Predicated region
        $region57: #{tpu_custom_call.1} parent=55 // pred_check
          %p684 = pneg %p188
        $region58: #{tpu_custom_call.1} parent=55 // pred_check_branch
          %686 = sbr.rel (%p684) target = $region60
        $region59: #{tpu_custom_call.1} parent=55 // pred_region
          %p687 = scmp.lt.s32.totalorder %s19, 3
          %s688 = scalar_select %p687, %s19, 3
          %s689 = smul.addr %s688, 8
          %s690 = scalar_lea.vmem %s6, %s689
        $region60: #{tpu_custom_call.1} parent=55 // pred_fallthru
          _
      $region56: #{tpu_custom_call.1} parent=5 // pred_fallthru
        _
    $region6: #{tpu_custom_call.1} parent=1 // loop_footer
      %s17 = sadd.s32 1, %s13
    $region7: #{tpu_custom_call.1} parent=1 // loop_footer_branch
      %12 = sbr.rel target = $region3
    $region8: #{tpu_custom_call.1} parent=1 // loop_exit
      _
    %691 = vsyncpa [#allocation3], 1
    %s692 = scalar_lea.sflag [#allocation3], 1
    %693 = vsyncpa %s692, 1

</llo_original>
